<compile_context>
chip_gen: v5e
topology: v5e:2x2
jax: 0.10.0
libtpu: 0.0.40
codegen_flags: <defaults>
</compile_context>

<pallas_src>
import functools

import numpy as np
import jax
import jax.numpy as jnp
from jax.experimental import pallas as pl
from jax.experimental.pallas import tpu as pltpu


def _vmem_spec():
    # whole-array block resident in VMEM (small operands, no grid tiling)
    return pl.BlockSpec(memory_space=pltpu.MemorySpace.VMEM)


# ----------------------------------------------------------------------------
# Kernel A: T-GCN propagation (LightGCN-style mean over layer outputs).
# ----------------------------------------------------------------------------
_TGCN_WHOLE_N_MAX = 1024   # above this, row-tile the dense adjacency per layer


def tgcn_whole_kernel(a_ref, h_ref, out_ref, *, layer_num):
    a = a_ref[...]
    h = h_ref[...]
    acc = h
    for _ in range(layer_num):
        h = jnp.dot(a, h, preferred_element_type=jnp.float32)
        acc = acc + h
    out_ref[...] = acc * (1.0 / float(layer_num + 1))


def tgcn_layer_kernel(a_ref, h_ref, out_ref):
    out_ref[...] = jnp.dot(a_ref[...], h_ref[...],
                           preferred_element_type=jnp.float32)


def run_tgcn(adj, h0, layer_num):
    N, D = h0.shape
    if N <= _TGCN_WHOLE_N_MAX:
        return pl.pallas_call(
            functools.partial(tgcn_whole_kernel, layer_num=layer_num),
            out_shape=jax.ShapeDtypeStruct((N, D), jnp.float32),
            in_specs=[_vmem_spec(), _vmem_spec()],
            out_specs=_vmem_spec(),
        )(adj, h0)

    # Large graphs: row-tile A per propagation layer, keep H whole-resident.
    tm = 512
    Np = ((N + tm - 1) // tm) * tm
    adj_p = jnp.pad(adj, ((0, Np - N), (0, Np - N))) if Np != N else adj
    h = jnp.pad(h0, ((0, Np - N), (0, 0))) if Np != N else h0
    layer_step = pl.pallas_call(
        tgcn_layer_kernel,
        out_shape=jax.ShapeDtypeStruct((Np, D), jnp.float32),
        grid=(Np // tm,),
        in_specs=[pl.BlockSpec((tm, Np), lambda i: (i, 0)),
                  pl.BlockSpec((Np, D), lambda i: (0, 0))],
        out_specs=pl.BlockSpec((tm, D), lambda i: (i, 0)),
        compiler_params=pltpu.CompilerParams(
            dimension_semantics=("parallel",)),
    )
    acc = h
    for _ in range(layer_num):
        h = layer_step(adj_p, h)
        acc = acc + h
    out = acc * (1.0 / float(layer_num + 1))
    return out[:N] if Np != N else out


# ----------------------------------------------------------------------------
# Kernel B: fused bidirectional GRU — both directions interleaved in ONE
# fori_loop.  PyTorch gate semantics (r, z, n), gate-major weights (dir,3,D,D),
# input projections for ALL timesteps precomputed (6 matmuls in the prologue).
#   x_ref    : (L*B, D)    time-major flattened input (row = t*B + b)
#   wih/whh  : (2, 3, D, D)
#   bih/bhh  : (2, 3, 1, D)
#   of/ob    : (L, B, D)   fwd / bwd hidden states (bwd already in orig. order)
#   xp_ref   : (2, 3, L*B, D) VMEM scratch for x @ W_ih + b_ih
# ----------------------------------------------------------------------------
def bigru_kernel(x_ref, wih_ref, whh_ref, bih_ref, bhh_ref, of_ref, ob_ref,
                 xp_ref, *, L, B, D):
    x = x_ref[...]
    for d in range(2):
        for g in range(3):
            xp_ref[d, g] = (jnp.dot(x, wih_ref[d, g],
                                    preferred_element_type=jnp.float32)
                            + bih_ref[d, g])
    whh = whh_ref[...]          # (2, 3, D, D)
    bhh = bhh_ref[...]          # (2, 3, 1, D)

    def gru_cell(h, xr, xz, xn, w, b):
        hr = jnp.dot(h, w[0], preferred_element_type=jnp.float32) + b[0]
        hz = jnp.dot(h, w[1], preferred_element_type=jnp.float32) + b[1]
        hn = jnp.dot(h, w[2], preferred_element_type=jnp.float32) + b[2]
        r = jax.nn.sigmoid(xr + hr)
        z = jax.nn.sigmoid(xz + hz)
        n = jnp.tanh(xn + r * hn)
        return (1.0 - z) * n + z * h

    def step(t, carry):
        hf, hb = carry
        tb = L - 1 - t                       # backward direction time index
        rows_f = pl.ds(t * B, B)
        rows_b = pl.ds(tb * B, B)
        hf = gru_cell(hf,
                      xp_ref[0, 0, rows_f, :], xp_ref[0, 1, rows_f, :],
                      xp_ref[0, 2, rows_f, :], whh[0], bhh[0])
        hb = gru_cell(hb,
                      xp_ref[1, 0, rows_b, :], xp_ref[1, 1, rows_b, :],
                      xp_ref[1, 2, rows_b, :], whh[1], bhh[1])
        of_ref[t] = hf
        ob_ref[tb] = hb                      # stored in original time order
        return (hf, hb)

    h0 = jnp.zeros((B, D), jnp.float32)
    jax.lax.fori_loop(0, L, step, (h0, h0), unroll=(L <= 16))


def run_bigru(x_tm, wih, whh, bih, bhh):
    """x_tm: (L, B, D) time-major input.  Returns (out_fwd, out_bwd), each
    (L, B, D) time-major, backward already in original time order."""
    L, B, D = x_tm.shape
    x_flat = x_tm.reshape(L * B, D)
    return pl.pallas_call(
        functools.partial(bigru_kernel, L=L, B=B, D=D),
        out_shape=(jax.ShapeDtypeStruct((L, B, D), jnp.float32),
                   jax.ShapeDtypeStruct((L, B, D), jnp.float32)),
        in_specs=[_vmem_spec()] * 5,
        out_specs=(_vmem_spec(), _vmem_spec()),
        scratch_shapes=[pltpu.VMEM((2, 3, L * B, D), jnp.float32)],
    )(x_flat, wih, whh, bih, bhh)


# ----------------------------------------------------------------------------
# Kernel C: single-direction GRU, FINAL STATE ONLY (short GRU).
# ----------------------------------------------------------------------------
def gru_last_kernel(x_ref, wih_ref, whh_ref, bih_ref, bhh_ref, out_ref, xp_ref,
                    *, L, B, D):
    x = x_ref[...]
    for g in range(3):
        xp_ref[g] = (jnp.dot(x, wih_ref[g], preferred_element_type=jnp.float32)
                     + bih_ref[g])
    whh = whh_ref[...]          # (3, D, D)
    bhh = bhh_ref[...]          # (3, 1, D)

    def step(t, h):
        rows = pl.ds(t * B, B)
        hr = jnp.dot(h, whh[0], preferred_element_type=jnp.float32) + bhh[0]
        hz = jnp.dot(h, whh[1], preferred_element_type=jnp.float32) + bhh[1]
        hn = jnp.dot(h, whh[2], preferred_element_type=jnp.float32) + bhh[2]
        r = jax.nn.sigmoid(xp_ref[0, rows, :] + hr)
        z = jax.nn.sigmoid(xp_ref[1, rows, :] + hz)
        n = jnp.tanh(xp_ref[2, rows, :] + r * hn)
        return (1.0 - z) * n + z * h

    h0 = jnp.zeros((B, D), jnp.float32)
    out_ref[...] = jax.lax.fori_loop(0, L, step, h0, unroll=(L <= 16))


def run_gru_last(x_tm, wih, whh, bih, bhh):
    L, B, D = x_tm.shape
    x_flat = x_tm.reshape(L * B, D)
    return pl.pallas_call(
        functools.partial(gru_last_kernel, L=L, B=B, D=D),
        out_shape=jax.ShapeDtypeStruct((B, D), jnp.float32),
        in_specs=[_vmem_spec()] * 5,
        out_specs=_vmem_spec(),
        scratch_shapes=[pltpu.VMEM((3, L * B, D), jnp.float32)],
    )(x_flat, wih, whh, bih, bhh)


# ----------------------------------------------------------------------------
# Kernel D: fused bin gate + attention + per-session sum.
#   b     = sigmoid(ef.w1f + eb.w1b)            (VPU lane reduction)
#   e_hat = b * ef + (1-b) * eb
#   beta  = tanh(h @ w2h + e_hat @ w2e) . v3    (split-weight MXU + reduction)
#   c     = beta * h ;  z_long = seg @ c
# ----------------------------------------------------------------------------
def gate_attn_kernel(h_ref, ef_ref, eb_ref, w1f_ref, w1b_ref, w2h_ref, w2e_ref,
                     v3_ref, seg_ref, c_ref, zl_ref):
    h = h_ref[...]
    ef = ef_ref[...]
    eb = eb_ref[...]
    b = jax.nn.sigmoid(
        jnp.sum(ef * w1f_ref[...] + eb * w1b_ref[...], axis=-1, keepdims=True))
    e_hat = b * ef + (1.0 - b) * eb
    tt = jnp.tanh(
        jnp.dot(h, w2h_ref[...], preferred_element_type=jnp.float32)
        + jnp.dot(e_hat, w2e_ref[...], preferred_element_type=jnp.float32))
    beta = jnp.sum(tt * v3_ref[...], axis=-1, keepdims=True)
    c = beta * h
    c_ref[...] = c
    zl_ref[...] = jnp.dot(seg_ref[...], c, preferred_element_type=jnp.float32)


def gate_attn(h_final, ef_sel, eb_sel, w1f, w1b, w2h, w2e, v3, seg):
    T, D = h_final.shape
    S = seg.shape[0]
    return pl.pallas_call(
        gate_attn_kernel,
        out_shape=(jax.ShapeDtypeStruct((T, D), jnp.float32),
                   jax.ShapeDtypeStruct((S, D), jnp.float32)),
        in_specs=[_vmem_spec()] * 9,
        out_specs=(_vmem_spec(), _vmem_spec()),
    )(h_final, ef_sel, eb_sel, w1f, w1b, w2h, w2e, v3, seg)


# ----------------------------------------------------------------------------
# Kernel E: fused final gate + scoring.  zf = f*z_long + (1-f)*z_short is
# recomputed per vocab tile (S x D of VPU work — free vs. the emb-tile DMA);
# the embedding streams in bf16, MXU accumulates in f32.
# ----------------------------------------------------------------------------
def score_kernel(zl_ref, zs_ref, w3_ref, b3_ref, emb_ref, out_ref):
    zl = zl_ref[...]
    zs = zs_ref[...]
    f = jax.nn.sigmoid(
        jnp.sum((zl + zs) * w3_ref[...], axis=-1, keepdims=True) + b3_ref[...])
    zf = f * zl + (1.0 - f) * zs
    out_ref[...] = jax.lax.dot_general(
        zf.astype(emb_ref.dtype), emb_ref[...],
        dimension_numbers=(((1,), (1,)), ((), ())),
        preferred_element_type=jnp.float32)


def score(z_long, z_short, w3row, b3, item_emb, tn=2048):
    S, D = z_long.shape
    V = item_emb.shape[0]
    tn = min(tn, ((V + 127) // 128) * 128)        # lane-aligned tile, <= 2048
    Vp = ((V + tn - 1) // tn) * tn
    if Vp != V:
        item_emb = jnp.pad(item_emb, ((0, Vp - V), (0, 0)))
    out = pl.pallas_call(
        score_kernel,
        out_shape=jax.ShapeDtypeStruct((S, Vp), jnp.float32),
        grid=(Vp // tn,),
        in_specs=[
            pl.BlockSpec((S, D), lambda j: (0, 0)),
            pl.BlockSpec((S, D), lambda j: (0, 0)),
            pl.BlockSpec((1, D), lambda j: (0, 0)),
            pl.BlockSpec((1, 1), lambda j: (0, 0)),
            # on v7x consider pipeline_mode=pl.Buffered(3) here if DMA exposed
            pl.BlockSpec((tn, D), lambda j: (j, 0)),
        ],
        out_specs=pl.BlockSpec((S, tn), lambda j: (0, j)),
        compiler_params=pltpu.CompilerParams(
            dimension_semantics=("parallel",)),
    )(z_long, z_short, w3row, b3, item_emb)
    return out[:, :V] if Vp != V else out


# ----------------------------------------------------------------------------
# Parameter construction (normal(0, 0.1) like reset_parameters).
# GRU weights are GATE-MAJOR: wih/whh (3, D, D) with gates [r, z, n],
# biases (3, 1, D).
# ----------------------------------------------------------------------------
def make_gru_dir_params(key, D, stdv=0.1):
    ks = jax.random.split(key, 4)
    w_ih = jax.random.normal(ks[0], (3 * D, D), jnp.float32) * stdv
    w_hh = jax.random.normal(ks[1], (3 * D, D), jnp.float32) * stdv
    b_ih = jax.random.normal(ks[2], (3 * D,), jnp.float32) * stdv
    b_hh = jax.random.normal(ks[3], (3 * D,), jnp.float32) * stdv
    wih = jnp.transpose(w_ih.reshape(3, D, D), (0, 2, 1))   # (3, Din, Dout)
    whh = jnp.transpose(w_hh.reshape(3, D, D), (0, 2, 1))
    return wih, whh, b_ih.reshape(3, 1, D), b_hh.reshape(3, 1, D)


def make_params(key, num_item, D, stdv=0.1):
    ks = jax.random.split(key, 10)
    p = {}
    # item embedding stored bf16 (halves the dominant HBM stream in scoring);
    # cast to f32 where gathered for the GCN path.
    p['item_emb'] = (jax.random.normal(ks[0], (num_item, D), jnp.float32)
                     * stdv).astype(jnp.bfloat16)
    # NOTE: reference's reset_parameters() overwrites bin_embedding row 0 too,
    # so padding_idx=0 does not stay zero at init; matched literally here.
    p['bin_emb'] = jax.random.normal(ks[1], (10, D), jnp.float32) * stdv

    gf = make_gru_dir_params(ks[2], D, stdv)     # bi-GRU forward direction
    gb = make_gru_dir_params(ks[3], D, stdv)     # bi-GRU backward direction
    gs = make_gru_dir_params(ks[4], D, stdv)     # short GRU
    p['bi_wih'] = jnp.stack([gf[0], gb[0]])      # (2, 3, D, D)
    p['bi_whh'] = jnp.stack([gf[1], gb[1]])
    p['bi_bih'] = jnp.stack([gf[2], gb[2]])      # (2, 3, 1, D)
    p['bi_bhh'] = jnp.stack([gf[3], gb[3]])
    p['sg_wih'], p['sg_whh'], p['sg_bih'], p['sg_bhh'] = gs

    w1 = jax.random.normal(ks[5], (1, 2 * D), jnp.float32) * stdv  # Linear(2D,1)
    p['w1f'] = w1[:, :D]                                           # (1, D)
    p['w1b'] = w1[:, D:]                                           # (1, D)
    w2 = jax.random.normal(ks[6], (D, 2 * D), jnp.float32) * stdv  # Linear(2D,D)
    p['w2h'] = w2[:, :D].T                                         # (D, D)
    p['w2e'] = w2[:, D:].T                                         # (D, D)
    p['v3'] = jax.random.normal(ks[7], (1, D), jnp.float32) * stdv   # Linear(D,1)
    p['w3row'] = jax.random.normal(ks[8], (1, D), jnp.float32) * stdv  # Linear(D,1)+b
    p['b3'] = (jax.random.normal(ks[9], (1,), jnp.float32) * stdv).reshape(1, 1)
    return p


# ----------------------------------------------------------------------------
# Full forward pass (eval mode: dropout is identity).
# ----------------------------------------------------------------------------
def te_gnn_forward(params, batch, layer_num):
    D = params['item_emb'].shape[1]
    items = batch['items']               # (N,)
    edge = batch['edge']                 # (2, E)
    edge_weight = batch['edge_weight']   # (E,)
    item2idx = batch['item2idx']         # (T,)
    bins = batch['bins']                 # (S, Lb)
    sess_len = batch['sess_len']         # python list[int], sum == T

    N = items.shape[0]
    S, Lb = bins.shape
    T = int(sum(sess_len))

    # ---- item embedding + graph propagation --------------------------------
    item_emb_f32 = params['item_emb'].astype(jnp.float32)
    h = jnp.take(item_emb_f32, items, axis=0)                            # (N, D)
    src, dst = edge[0], edge[1]
    adj = jnp.zeros((N, N), jnp.float32).at[dst, src].add(edge_weight)
    h_nodes = run_tgcn(adj, h, layer_num)                                # (N, D)
    h_final = jnp.take(h_nodes, item2idx, axis=0)                        # (T, D)

    # ---- bin embedding (gathered directly time-major) + fused bi-GRU -------
    e_flat_tm = jnp.take(params['bin_emb'], bins.T.reshape(-1), axis=0)  # (Lb*S, D)
    e_tm = e_flat_tm.reshape(Lb, S, D)
    ef_tm, eb_tm = run_bigru(e_tm, params['bi_wih'], params['bi_whh'],
                             params['bi_bih'], params['bi_bhh'])         # (Lb,S,D)

    # ---- right-aligned selection (static sess_len), time-major indexing ----
    # TODO(synk): assumes bins are right-aligned (left-padded), matching the
    # reference's e[-l:] convention.
    ef_sel = jnp.concatenate(
        [ef_tm[Lb - l:, s, :] for s, l in enumerate(sess_len)], axis=0)  # (T, D)
    eb_sel = jnp.concatenate(
        [eb_tm[Lb - l:, s, :] for s, l in enumerate(sess_len)], axis=0)  # (T, D)

    # segment-membership matrix for the per-session sum (static sess_len)
    seg_np = np.zeros((S, T), np.float32)
    off = 0
    for s, l in enumerate(sess_len):
        seg_np[s, off:off + l] = 1.0
        off += l
    seg = jnp.asarray(seg_np)

    # ---- fused bin gate + attention + z_long -------------------------------
    c, z_long = gate_attn(h_final, ef_sel, eb_sel, params['w1f'], params['w1b'],
                          params['w2h'], params['w2e'], params['v3'], seg)

    # ---- right-aligned zero padding (time-major) + short GRU (last state) --
    L_max = max(sess_len)
    c_pad_tm = jnp.zeros((L_max, S, D), jnp.float32)
    off = 0
    for s, l in enumerate(sess_len):
        c_pad_tm = c_pad_tm.at[L_max - l:, s, :].set(c[off:off + l])
        off += l
    z_short = run_gru_last(c_pad_tm, params['sg_wih'], params['sg_whh'],
                           params['sg_bih'], params['sg_bhh'])           # (S, D)

    # ---- fused final gate + scoring -----------------------------------------
    scores = score(z_long, z_short, params['w3row'], params['b3'],
                   params['item_emb'])                                   # (S, V)
    return scores


# ----------------------------------------------------------------------------
if __name__ == "__main__":
    D = 32            # args.dim
    LAYER_NUM = 2     # args.layer_num
    NUM_ITEM = 1024   # vocabulary size
    S = 2             # number of sessions in the batch
    SESS_LEN = [3, 5]
    T = sum(SESS_LEN)
    LB = 5            # padded bin-sequence length
    N_NODES = 8
    N_EDGES = 10

    key = jax.random.PRNGKey(0)
    k_par, k_it, k_ed, k_ew, k_i2x, k_bin = jax.random.split(key, 6)

    params = make_params(k_par, NUM_ITEM, D)

    batch = {
        'items': jax.random.randint(k_it, (N_NODES,), 0, NUM_ITEM, dtype=jnp.int32),
        'edge': jax.random.randint(k_ed, (2, N_EDGES), 0, N_NODES, dtype=jnp.int32),
        'edge_weight': jax.random.uniform(k_ew, (N_EDGES,), jnp.float32),
        'item2idx': jax.random.randint(k_i2x, (T,), 0, N_NODES, dtype=jnp.int32),
        'bins': jax.random.randint(k_bin, (S, LB), 0, 10, dtype=jnp.int32),
        'sess_len': SESS_LEN,
    }

    scores = te_gnn_forward(params, batch, LAYER_NUM)
    scores = jax.block_until_ready(scores)
    assert scores.shape == (S, NUM_ITEM)
    assert bool(jnp.all(jnp.isfinite(scores)))
    print("KERNEL_OK")
</pallas_src>

<mosaic_0001>
module attributes {stable_mosaic.version = 11 : i64} {
  func.func @tgcn_whole_kernel(%arg0: memref<8x8xf32, #tpu.memory_space<vmem>>, %arg1: memref<8x32xf32, #tpu.memory_space<vmem>>, %arg2: memref<8x32xf32, #tpu.memory_space<vmem>>) attributes {dimension_semantics = [], scalar_prefetch = 0 : i64, scratch_operands = 0 : i64, tpu.core_type = #tpu.core_type<tc>} {
    %c0 = arith.constant 0 : index
    %c0_0 = arith.constant 0 : index
    %0 = vector.load %arg0[%c0, %c0_0] : memref<8x8xf32, #tpu.memory_space<vmem>>, vector<8x8xf32>
    %c0_1 = arith.constant 0 : index
    %c0_2 = arith.constant 0 : index
    %1 = vector.load %arg1[%c0_1, %c0_2] : memref<8x32xf32, #tpu.memory_space<vmem>>, vector<8x32xf32>
    %cst = arith.constant dense<0.000000e+00> : vector<8x32xf32>
    %2 = tpu.matmul %0, %1, %cst {dimension_numbers = #tpu.dot_dimension_numbers<[1], [0], [0], [1], [0, 0, 1, 1], [], []>} : vector<8x8xf32>, vector<8x32xf32>, vector<8x32xf32> -> vector<8x32xf32>
    %3 = arith.addf %1, %2 : vector<8x32xf32>
    %cst_3 = arith.constant dense<0.000000e+00> : vector<8x32xf32>
    %4 = tpu.matmul %0, %2, %cst_3 {dimension_numbers = #tpu.dot_dimension_numbers<[1], [0], [0], [1], [0, 0, 1, 1], [], []>} : vector<8x8xf32>, vector<8x32xf32>, vector<8x32xf32> -> vector<8x32xf32>
    %5 = arith.addf %3, %4 : vector<8x32xf32>
    %cst_4 = arith.constant 0.333333343 : f32
    %6 = vector.broadcast %cst_4 : f32 to vector<8x32xf32>
    %7 = arith.mulf %5, %6 : vector<8x32xf32>
    %c0_5 = arith.constant 0 : index
    %c0_6 = arith.constant 0 : index
    %8 = vector.load %arg2[%c0_5, %c0_6] : memref<8x32xf32, #tpu.memory_space<vmem>>, vector<8x32xf32>
    tpu.vector_store %arg2[%c0_5, %c0_6], %7 {strides = array<i32>} : memref<8x32xf32, #tpu.memory_space<vmem>>, vector<8x32xf32>,
    return
  }
}

</mosaic_0001>

<llo_original>
// kernel: tpu_custom_call.1
$region0: #{tpu_custom_call.1}
  #allocation0 [shape = 'u32[]', space=smem, size = 0x4, offset = 0x4, fixed_abs, tag = 'smem constant byte address 0x4 - core index']
  #allocation1 [shape = 'u32[72,128]{1,0:T(1,128)}', space=vmem, size = 0x9000, scoped, tag = 'internal scratch']
  %s0 = inlined_call_operand.hbm [shape: f32[8,8], index: 0, kind: input, shape index: {}]
  %s1 = inlined_call_operand.hbm [shape: f32[8,32], index: 1, kind: input, shape index: {}]
  %s2 = inlined_call_operand.hbm [shape: f32[8,32], index: 2, kind: output, shape index: {}]
  %s3 = sld [smem:[#allocation0]]
  $region26: #{tpu_custom_call.1} parent=0
    _
  %s5 = ssub.s32 1, %s3
  %s6 = scalar_select 0, %s5, %s3
  $region1: #{tpu_custom_call.1} parent=0
    #allocation2 [shape = 'u8[4096]{0}', space=vmem, size = 0x1000, scoped, tag = 'input window, operand 0, single buffered']
    #allocation3 [shape = 's32[1]{0}', space=sflag, size = 0x4, scoped, tag = 'scoped memory for tpu_custom_call.1']
    #allocation4 [shape = 's32[1]{0}', space=sflag, size = 0x4, scoped, tag = 'scoped memory for tpu_custom_call.1']
    #allocation5 [shape = 'u8[4096]{0}', space=vmem, size = 0x1000, scoped, tag = 'input window, operand 1, single buffered']
    #allocation6 [shape = 's32[1]{0}', space=sflag, size = 0x4, scoped, tag = 'scoped memory for tpu_custom_call.1']
    #allocation7 [shape = 'u8[4096]{0}', space=vmem, size = 0x1000, scoped, tag = 'output window, operand 0, single buffered']
    %7 = vsyncpa [#allocation3], 0
    %8 = vsyncpa [#allocation6], 0
    %9 = vsyncpa [#allocation4], 0
    // Predicated region
    $region2: #{tpu_custom_call.1} parent=1 // pred_check
      _
    $region3: #{tpu_custom_call.1} parent=1 // pred_check_branch
      %11 = sbr.rel (0) target = $region5
    $region4: #{tpu_custom_call.1} parent=1 // pred_region
      %13 = vsyncadd [#allocation3], 0
      %s15 = sshll.u32 %s0, 4
      %s16 = int_to_ptr.hbm [resolvable:$true] %s15
      %s17 = sshll.u32 [#allocation2], 4
      %s18 = int_to_ptr.vmem [resolvable:$true] %s17
      %20 = dma.hbm_to_vmem [thread:$0]  %s16, 128, %s18, [#allocation3]
    $region5: #{tpu_custom_call.1} parent=1 // pred_fallthru
      _
    // Predicated region
    $region6: #{tpu_custom_call.1} parent=1 // pred_check
      _
    $region7: #{tpu_custom_call.1} parent=1 // pred_check_branch
      %22 = sbr.rel (0) target = $region9
    $region8: #{tpu_custom_call.1} parent=1 // pred_region
      %24 = vsyncadd [#allocation6], 0
      %s26 = sshll.u32 %s1, 4
      %s27 = int_to_ptr.hbm [resolvable:$true] %s26
      %s28 = sshll.u32 [#allocation5], 4
      %s29 = int_to_ptr.vmem [resolvable:$true] %s28
      %31 = dma.hbm_to_vmem [thread:$0]  %s27, 128, %s29, [#allocation6]
    $region9: #{tpu_custom_call.1} parent=1 // pred_fallthru
      _
    // Predicated region
    $region10: #{tpu_custom_call.1} parent=1 // pred_check
      _
    $region11: #{tpu_custom_call.1} parent=1 // pred_check_branch
      %33 = sbr.rel (0) target = $region13
    $region12: #{tpu_custom_call.1} parent=1 // pred_region
      %35 = dma.done [#allocation3], 128
    $region13: #{tpu_custom_call.1} parent=1 // pred_fallthru
      _
    // Predicated region
    $region14: #{tpu_custom_call.1} parent=1 // pred_check
      _
    $region15: #{tpu_custom_call.1} parent=1 // pred_check_branch
      %37 = sbr.rel (0) target = $region17
    $region16: #{tpu_custom_call.1} parent=1 // pred_region
      %39 = dma.done [#allocation6], 128
    $region17: #{tpu_custom_call.1} parent=1 // pred_fallthru
      _
    %v40 = vld [vmem:[#allocation2] sm:$0xff]
    %v41 = vld [vmem:[#allocation5] sm:$0xff]
    %vm42 = vcmask 64512
    %v44 = vsel %vm42, %v40, 0
    %46 = vmatpush.msra.mxu0 0.0
    %47 = vmatpush.msra.mxu0 0.0
    %48 = vmatpush.msra.mxu0 0.0
    %49 = vmatpush.msra.mxu0 0.0
    %50 = vmatpush.msra.mxu0 0.0
    %51 = vmatpush.msra.mxu0 0.0
    %52 = vmatpush.msra.mxu0 0.0
    %53 = vmatpush.msra.mxu0 0.0
    %54 = vmatpush.msra.mxu0 0.0
    %55 = vmatpush.msra.mxu0 0.0
    %56 = vmatpush.msra.mxu0 0.0
    %57 = vmatpush.msra.mxu0 0.0
    %58 = vmatpush.msra.mxu0 0.0
    %59 = vmatpush.msra.mxu0 0.0
    %60 = vmatpush.msra.mxu0 0.0
    %61 = vmatpush.msra.mxu0 %v41
    %62 = vmatmul.f32.gmra.mxu0 %v44
    %v63 = vpop.f32.mrf.mxu0
    %v64 = vadd.f32 0.0, %v63
    %65 = vdwg.mxu0
    %v66 = vadd.f32 %v41, %v64
    %67 = vmatpush.msra.mxu0 0.0
    %68 = vmatpush.msra.mxu0 0.0
    %69 = vmatpush.msra.mxu0 0.0
    %70 = vmatpush.msra.mxu0 0.0
    %71 = vmatpush.msra.mxu0 0.0
    %72 = vmatpush.msra.mxu0 0.0
    %73 = vmatpush.msra.mxu0 0.0
    %74 = vmatpush.msra.mxu0 0.0
    %75 = vmatpush.msra.mxu0 0.0
    %76 = vmatpush.msra.mxu0 0.0
    %77 = vmatpush.msra.mxu0 0.0
    %78 = vmatpush.msra.mxu0 0.0
    %79 = vmatpush.msra.mxu0 0.0
    %80 = vmatpush.msra.mxu0 0.0
    %81 = vmatpush.msra.mxu0 0.0
    %82 = vmatpush.msra.mxu0 %v64
    %83 = vmatmul.f32.gmra.mxu0 %v44
    %v84 = vpop.f32.mrf.mxu0
    %v85 = vadd.f32 0.0, %v84
    %86 = vdwg.mxu0
    %v87 = vadd.f32 %v66, %v85
    %v88 = vmul.f32 %v87, 0.33333334
    %vm89 = vcmask 261120
    %90 = vst.msk [vmem:[#allocation7] sm:$0xff] %vm89, %v88
    // Predicated region
    $region18: #{tpu_custom_call.1} parent=1 // pred_check
      _
    $region19: #{tpu_custom_call.1} parent=1 // pred_check_branch
      %92 = sbr.rel (0) target = $region21
    $region20: #{tpu_custom_call.1} parent=1 // pred_region
      %94 = vsyncadd [#allocation4], 0
      %s96 = sshll.u32 [#allocation7], 4
      %s97 = int_to_ptr.vmem [resolvable:$true] %s96
      %s98 = sshll.u32 %s2, 4
      %s99 = int_to_ptr.hbm [resolvable:$true] %s98
      %101 = dma.vmem_to_hbm [thread:$0]  %s97, 128, %s99, [#allocation4]
    $region21: #{tpu_custom_call.1} parent=1 // pred_fallthru
      _
    // Predicated region
    $region22: #{tpu_custom_call.1} parent=1 // pred_check
      _
    $region23: #{tpu_custom_call.1} parent=1 // pred_check_branch
      %103 = sbr.rel (0) target = $region25
    $region24: #{tpu_custom_call.1} parent=1 // pred_region
      %105 = dma.done [#allocation4], 128
    $region25: #{tpu_custom_call.1} parent=1 // pred_fallthru
      _
    %106 = vsyncpa [#allocation3], 1
    %107 = vsyncpa [#allocation6], 1
    %108 = vsyncpa [#allocation4], 1

</llo_original>
